<compile_context>
chip_gen: v7x
topology: tpu7x:2x2x1
jax: 0.10.0
libtpu: 0.0.40
codegen_flags: <defaults>
</compile_context>

<pallas_src>
import jax
import jax.numpy as jnp
from jax.experimental import pallas as pl
from jax.experimental.pallas import tpu as pltpu


def _make_up_kernel(H, W):
    HW = H * W
    PAD = W + 1  # flat zero padding on each side of the flattened image

    def kernel(x_ref, w_ref, m_ref, b_ref, o_ref, xp_ref, col_ref):
        # x_ref  : (Cin, H*W)          one image, NCHW-contiguous flat view
        # w_ref  : (4*Cout, 9*Cin)     folded, phase- and shift-concat weights
        # m_ref  : (2, H*W)            column-validity masks for dc=-1 / dc=+1
        # b_ref  : (4*Cout, 1)         f32 bias, tiled over the 4 phases
        # o_ref  : (4*Cout, H*W)       phase-major output, lane dim = H*W
        # xp_ref : (Cin, H*W + 2*PAD)  scratch: flat zero-padded input
        # col_ref: (9*Cin, H*W)        scratch: im2col of the 9 shifted copies
        Cin = x_ref.shape[0]

        # Flat zero-padded copy of the image (built in VMEM, never in HBM).
        xp_ref[...] = jnp.zeros_like(xp_ref)
        xp_ref[:, PAD:PAD + HW] = x_ref[...]

        # Build the im2col block: row t*Cin+ci holds x[ci, r+dr, s+dc]
        # (zero-extended) at flat position r*W+s, for shift t = (dr, dc).
        t = 0
        for dr in (-1, 0, 1):
            for dc in (-1, 0, 1):
                start = PAD + dr * W + dc
                patch = xp_ref[:, start:start + HW]
                # Row out-of-range reads land in the zero padding; column
                # out-of-range reads wrap to the neighbouring row and must be
                # masked out explicitly.
                if dc == -1:
                    patch = patch * m_ref[0:1, :]
                elif dc == 1:
                    patch = patch * m_ref[1:2, :]
                col_ref[t * Cin:(t + 1) * Cin, :] = patch
                t += 1

        # One wide MXU matmul per image: (4*Cout, 9*Cin) x (9*Cin, H*W).
        acc = jnp.dot(w_ref[...], col_ref[...],
                      preferred_element_type=jnp.float32)
        o_ref[...] = (acc + b_ref[...]).astype(o_ref.dtype)

    return kernel


# _TAPS[a][dr]: original 3x3 taps k (0..2) that, for output phase `a`, read the
# original input at row shift `dr` (tap k of out index 2r+a reads original
# index r + (a + k - 1)//2).  Taps sharing a shift get their weights summed.
_TAPS = {
    0: {-1: (0,), 0: (1, 2), 1: ()},
    1: {-1: (), 0: (0, 1), 1: (2,)},
}


def _fold_weights(w_oihw):
    """(Cout, Cin, 3, 3) OIHW -> (4*Cout, 9*Cin) phase-major / shift-major."""
    Cout, Cin = int(w_oihw.shape[0]), int(w_oihw.shape[1])
    w = jnp.transpose(w_oihw, (2, 3, 1, 0))  # HWIO: (3, 3, Cin, Cout)
    rows = []
    for a in (0, 1):
        for b in (0, 1):
            cols = []
            for dr in (-1, 0, 1):
                for dc in (-1, 0, 1):
                    kis, kjs = _TAPS[a][dr], _TAPS[b][dc]
                    if kis and kjs:
                        wk = sum(w[ki, kj] for ki in kis for kj in kjs)
                    else:
                        wk = jnp.zeros((Cin, Cout), w.dtype)
                    cols.append(wk.T)                      # (Cout, Cin)
            rows.append(jnp.concatenate(cols, axis=1))     # (Cout, 9*Cin)
    return jnp.concatenate(rows, axis=0)                   # (4*Cout, 9*Cin)


def _column_masks(H, W, dtype):
    """(2, H*W) validity masks for column shifts dc=-1 (row 0) and dc=+1."""
    s = jnp.arange(W)
    m_m1 = (s >= 1).astype(dtype)          # s + (-1) >= 0
    m_p1 = (s <= W - 2).astype(dtype)      # s + 1 <= W - 1
    return jnp.stack([jnp.tile(m_m1, H), jnp.tile(m_p1, H)], axis=0)


def up_forward(x_nchw, w_oihw, bias):
    """Up.forward: nearest-2x upsample -> Conv2d(k=3, s=1, p=1). NCHW in/out."""
    N, Cin, H, W = x_nchw.shape
    Cout = int(w_oihw.shape[0])
    P = 4 * Cout
    HW = H * W
    dt = x_nchw.dtype

    x_flat = x_nchw.reshape(N, Cin, HW)               # contiguous -> free view
    w_big = _fold_weights(w_oihw).astype(dt)          # (4*Cout, 9*Cin)
    masks = _column_masks(H, W, dt)                   # (2, H*W)
    b_col = jnp.tile(jnp.asarray(bias, jnp.float32), 4).reshape(P, 1)

    kernel = _make_up_kernel(H, W)

    out_flat = pl.pallas_call(
        kernel,
        out_shape=jax.ShapeDtypeStruct((N, P, HW), dt),
        grid_spec=pltpu.PrefetchScalarGridSpec(
            num_scalar_prefetch=0,
            grid=(N,),
            in_specs=[
                pl.BlockSpec((pl.Squeezed(), Cin, HW), lambda n: (n, 0, 0)),
                pl.BlockSpec((P, 9 * Cin), lambda n: (0, 0)),
                pl.BlockSpec((2, HW), lambda n: (0, 0)),
                pl.BlockSpec((P, 1), lambda n: (0, 0)),
            ],
            out_specs=pl.BlockSpec((pl.Squeezed(), P, HW),
                                   lambda n: (n, 0, 0)),
            scratch_shapes=[
                pltpu.VMEM((Cin, HW + 2 * (W + 1)), dt),   # padded input
                pltpu.VMEM((9 * Cin, HW), dt),             # im2col block
            ],
        ),
        compiler_params=pltpu.CompilerParams(
            dimension_semantics=("parallel",)),
    )(x_flat, w_big, masks, b_col)

    # Epilogue: split phase-major rows into (a, b, c) and interleave into the
    # 2x-upsampled spatial grid with a single transpose straight to NCHW.
    out = out_flat.reshape(N, 2, 2, Cout, H, W)
    out = jnp.transpose(out, (0, 3, 4, 1, 5, 2)).reshape(N, Cout, 2 * H, 2 * W)
    return out


def up_reference(x_nchw, w_oihw, bias):
    """Pure-JAX reference: Upsample(nearest, 2) -> Conv2d(k=3, p=1)."""
    up = jnp.repeat(jnp.repeat(x_nchw, 2, axis=2), 2, axis=3)
    out = jax.lax.conv_general_dilated(
        up, w_oihw, window_strides=(1, 1), padding=((1, 1), (1, 1)),
        dimension_numbers=("NCHW", "OIHW", "NCHW"))
    return out + bias[None, :, None, None]


if __name__ == "__main__":
    key = jax.random.PRNGKey(0)
    kx, kw, kb = jax.random.split(key, 3)

    N, Cin, Cout, H, W = 2, 4, 8, 16, 16
    x = jax.random.normal(kx, (N, Cin, H, W), dtype=jnp.float32)
    # Deterministic synthetic parameters for Conv2d(c_in=4, c_out=8, k=3).
    w = jax.random.normal(kw, (Cout, Cin, 3, 3), dtype=jnp.float32) * 0.1
    b = jax.random.normal(kb, (Cout,), dtype=jnp.float32) * 0.1

    out = jax.block_until_ready(jax.jit(up_forward)(x, w, b))
    ref = jax.block_until_ready(up_reference(x, w, b))

    assert out.shape == (N, Cout, 2 * H, 2 * W), out.shape
    assert jnp.allclose(out, ref, atol=1e-4, rtol=1e-4), (
        float(jnp.max(jnp.abs(out - ref))))
    print("KERNEL_OK")
</pallas_src>

<mosaic_0001>
module attributes {stable_mosaic.version = 11 : i64} {
  func.func @kernel(%arg0: i32, %arg1: memref<1x4x256xf32, #tpu.memory_space<vmem>>, %arg2: memref<32x36xf32, #tpu.memory_space<vmem>>, %arg3: memref<2x256xf32, #tpu.memory_space<vmem>>, %arg4: memref<32x1xf32, #tpu.memory_space<vmem>>, %arg5: memref<1x32x256xf32, #tpu.memory_space<vmem>>, %arg6: memref<4x290xf32, #tpu.memory_space<vmem>>, %arg7: memref<36x256xf32, #tpu.memory_space<vmem>>) attributes {dimension_semantics = [#tpu.dimension_semantics<parallel>], iteration_bounds = array<i64: 2>, scalar_prefetch = 0 : i64, scratch_operands = 2 : i64, tpu.core_type = #tpu.core_type<tc>, window_params = [{transform_indices = @transform_0, window_bounds = array<i64: 1, 4, 256>}, {pipeline_mode = #tpu.pipeline_mode<synchronous>, transform_indices = @transform_1, window_bounds = array<i64: 32, 36>}, {pipeline_mode = #tpu.pipeline_mode<synchronous>, transform_indices = @transform_2, window_bounds = array<i64: 2, 256>}, {pipeline_mode = #tpu.pipeline_mode<synchronous>, transform_indices = @transform_3, window_bounds = array<i64: 32, 1>}, {transform_indices = @transform_4, window_bounds = array<i64: 1, 32, 256>}]} {
    %cst = arith.constant 0.000000e+00 : f32
    %0 = vector.broadcast %cst : f32 to vector<4x290xf32>
    %c0 = arith.constant 0 : index
    %c0_0 = arith.constant 0 : index
    %1 = vector.load %arg6[%c0, %c0_0] : memref<4x290xf32, #tpu.memory_space<vmem>>, vector<4x290xf32>
    tpu.vector_store %arg6[%c0, %c0_0], %0 {strides = array<i32>} : memref<4x290xf32, #tpu.memory_space<vmem>>, vector<4x290xf32>,
    %c0_1 = arith.constant 0 : index
    %c0_2 = arith.constant 0 : index
    %c0_3 = arith.constant 0 : index
    %2 = vector.load %arg1[%c0_1, %c0_2, %c0_3] : memref<1x4x256xf32, #tpu.memory_space<vmem>>, vector<1x4x256xf32>
    %3 = vector.shape_cast %2 : vector<1x4x256xf32> to vector<4x256xf32>
    %c0_4 = arith.constant 0 : index
    %c17 = arith.constant 17 : index
    %4 = vector.load %arg6[%c0_4, %c17] : memref<4x290xf32, #tpu.memory_space<vmem>>, vector<4x256xf32>
    tpu.vector_store %arg6[%c0_4, %c17], %3 {strides = array<i32>} : memref<4x290xf32, #tpu.memory_space<vmem>>, vector<4x256xf32>,
    %c0_5 = arith.constant 0 : index
    %c0_6 = arith.constant 0 : index
    %5 = vector.load %arg6[%c0_5, %c0_6] : memref<4x290xf32, #tpu.memory_space<vmem>>, vector<4x256xf32>
    %c0_7 = arith.constant 0 : index
    %c0_8 = arith.constant 0 : index
    %6 = vector.load %arg3[%c0_7, %c0_8] : memref<2x256xf32, #tpu.memory_space<vmem>>, vector<1x256xf32>
    %7 = vector.broadcast %6 : vector<1x256xf32> to vector<4x256xf32>
    %8 = arith.mulf %5, %7 : vector<4x256xf32>
    %c0_9 = arith.constant 0 : index
    %c0_10 = arith.constant 0 : index
    %9 = vector.load %arg7[%c0_9, %c0_10] : memref<36x256xf32, #tpu.memory_space<vmem>>, vector<4x256xf32>
    tpu.vector_store %arg7[%c0_9, %c0_10], %8 {strides = array<i32>} : memref<36x256xf32, #tpu.memory_space<vmem>>, vector<4x256xf32>,
    %c0_11 = arith.constant 0 : index
    %c1 = arith.constant 1 : index
    %10 = vector.load %arg6[%c0_11, %c1] : memref<4x290xf32, #tpu.memory_space<vmem>>, vector<4x256xf32>
    %c4 = arith.constant 4 : index
    %c0_12 = arith.constant 0 : index
    %11 = vector.load %arg7[%c4, %c0_12] : memref<36x256xf32, #tpu.memory_space<vmem>>, vector<4x256xf32>
    tpu.vector_store %arg7[%c4, %c0_12], %10 {strides = array<i32>} : memref<36x256xf32, #tpu.memory_space<vmem>>, vector<4x256xf32>,
    %c0_13 = arith.constant 0 : index
    %c2 = arith.constant 2 : index
    %12 = vector.load %arg6[%c0_13, %c2] : memref<4x290xf32, #tpu.memory_space<vmem>>, vector<4x256xf32>
    %c1_14 = arith.constant 1 : index
    %c0_15 = arith.constant 0 : index
    %13 = vector.load %arg3[%c1_14, %c0_15] : memref<2x256xf32, #tpu.memory_space<vmem>>, vector<1x256xf32>
    %14 = vector.broadcast %13 : vector<1x256xf32> to vector<4x256xf32>
    %15 = arith.mulf %12, %14 : vector<4x256xf32>
    %c8 = arith.constant 8 : index
    %c0_16 = arith.constant 0 : index
    %16 = vector.load %arg7[%c8, %c0_16] : memref<36x256xf32, #tpu.memory_space<vmem>>, vector<4x256xf32>
    tpu.vector_store %arg7[%c8, %c0_16], %15 {strides = array<i32>} : memref<36x256xf32, #tpu.memory_space<vmem>>, vector<4x256xf32>,
    %c0_17 = arith.constant 0 : index
    %c16 = arith.constant 16 : index
    %17 = vector.load %arg6[%c0_17, %c16] : memref<4x290xf32, #tpu.memory_space<vmem>>, vector<4x256xf32>
    %c0_18 = arith.constant 0 : index
    %c0_19 = arith.constant 0 : index
    %18 = vector.load %arg3[%c0_18, %c0_19] : memref<2x256xf32, #tpu.memory_space<vmem>>, vector<1x256xf32>
    %19 = vector.broadcast %18 : vector<1x256xf32> to vector<4x256xf32>
    %20 = arith.mulf %17, %19 : vector<4x256xf32>
    %c12 = arith.constant 12 : index
    %c0_20 = arith.constant 0 : index
    %21 = vector.load %arg7[%c12, %c0_20] : memref<36x256xf32, #tpu.memory_space<vmem>>, vector<4x256xf32>
    tpu.vector_store %arg7[%c12, %c0_20], %20 {strides = array<i32>} : memref<36x256xf32, #tpu.memory_space<vmem>>, vector<4x256xf32>,
    %c0_21 = arith.constant 0 : index
    %c17_22 = arith.constant 17 : index
    %22 = vector.load %arg6[%c0_21, %c17_22] : memref<4x290xf32, #tpu.memory_space<vmem>>, vector<4x256xf32>
    %c16_23 = arith.constant 16 : index
    %c0_24 = arith.constant 0 : index
    %23 = vector.load %arg7[%c16_23, %c0_24] : memref<36x256xf32, #tpu.memory_space<vmem>>, vector<4x256xf32>
    tpu.vector_store %arg7[%c16_23, %c0_24], %22 {strides = array<i32>} : memref<36x256xf32, #tpu.memory_space<vmem>>, vector<4x256xf32>,
    %c0_25 = arith.constant 0 : index
    %c18 = arith.constant 18 : index
    %24 = vector.load %arg6[%c0_25, %c18] : memref<4x290xf32, #tpu.memory_space<vmem>>, vector<4x256xf32>
    %c1_26 = arith.constant 1 : index
    %c0_27 = arith.constant 0 : index
    %25 = vector.load %arg3[%c1_26, %c0_27] : memref<2x256xf32, #tpu.memory_space<vmem>>, vector<1x256xf32>
    %26 = vector.broadcast %25 : vector<1x256xf32> to vector<4x256xf32>
    %27 = arith.mulf %24, %26 : vector<4x256xf32>
    %c20 = arith.constant 20 : index
    %c0_28 = arith.constant 0 : index
    %28 = vector.load %arg7[%c20, %c0_28] : memref<36x256xf32, #tpu.memory_space<vmem>>, vector<4x256xf32>
    tpu.vector_store %arg7[%c20, %c0_28], %27 {strides = array<i32>} : memref<36x256xf32, #tpu.memory_space<vmem>>, vector<4x256xf32>,
    %c0_29 = arith.constant 0 : index
    %c32 = arith.constant 32 : index
    %29 = vector.load %arg6[%c0_29, %c32] : memref<4x290xf32, #tpu.memory_space<vmem>>, vector<4x256xf32>
    %c0_30 = arith.constant 0 : index
    %c0_31 = arith.constant 0 : index
    %30 = vector.load %arg3[%c0_30, %c0_31] : memref<2x256xf32, #tpu.memory_space<vmem>>, vector<1x256xf32>
    %31 = vector.broadcast %30 : vector<1x256xf32> to vector<4x256xf32>
    %32 = arith.mulf %29, %31 : vector<4x256xf32>
    %c24 = arith.constant 24 : index
    %c0_32 = arith.constant 0 : index
    %33 = vector.load %arg7[%c24, %c0_32] : memref<36x256xf32, #tpu.memory_space<vmem>>, vector<4x256xf32>
    tpu.vector_store %arg7[%c24, %c0_32], %32 {strides = array<i32>} : memref<36x256xf32, #tpu.memory_space<vmem>>, vector<4x256xf32>,
    %c0_33 = arith.constant 0 : index
    %c33 = arith.constant 33 : index
    %34 = vector.load %arg6[%c0_33, %c33] : memref<4x290xf32, #tpu.memory_space<vmem>>, vector<4x256xf32>
    %c28 = arith.constant 28 : index
    %c0_34 = arith.constant 0 : index
    %35 = vector.load %arg7[%c28, %c0_34] : memref<36x256xf32, #tpu.memory_space<vmem>>, vector<4x256xf32>
    tpu.vector_store %arg7[%c28, %c0_34], %34 {strides = array<i32>} : memref<36x256xf32, #tpu.memory_space<vmem>>, vector<4x256xf32>,
    %c0_35 = arith.constant 0 : index
    %c34 = arith.constant 34 : index
    %36 = vector.load %arg6[%c0_35, %c34] : memref<4x290xf32, #tpu.memory_space<vmem>>, vector<4x256xf32>
    %c1_36 = arith.constant 1 : index
    %c0_37 = arith.constant 0 : index
    %37 = vector.load %arg3[%c1_36, %c0_37] : memref<2x256xf32, #tpu.memory_space<vmem>>, vector<1x256xf32>
    %38 = vector.broadcast %37 : vector<1x256xf32> to vector<4x256xf32>
    %39 = arith.mulf %36, %38 : vector<4x256xf32>
    %c32_38 = arith.constant 32 : index
    %c0_39 = arith.constant 0 : index
    %40 = vector.load %arg7[%c32_38, %c0_39] : memref<36x256xf32, #tpu.memory_space<vmem>>, vector<4x256xf32>
    tpu.vector_store %arg7[%c32_38, %c0_39], %39 {strides = array<i32>} : memref<36x256xf32, #tpu.memory_space<vmem>>, vector<4x256xf32>,
    %c0_40 = arith.constant 0 : index
    %c0_41 = arith.constant 0 : index
    %41 = vector.load %arg2[%c0_40, %c0_41] : memref<32x36xf32, #tpu.memory_space<vmem>>, vector<32x36xf32>
    %c0_42 = arith.constant 0 : index
    %c0_43 = arith.constant 0 : index
    %42 = vector.load %arg7[%c0_42, %c0_43] : memref<36x256xf32, #tpu.memory_space<vmem>>, vector<36x256xf32>
    %cst_44 = arith.constant dense<0.000000e+00> : vector<32x256xf32>
    %43 = tpu.matmul %41, %42, %cst_44 {dimension_numbers = #tpu.dot_dimension_numbers<[1], [0], [0], [1], [0, 0, 1, 1], [], []>} : vector<32x36xf32>, vector<36x256xf32>, vector<32x256xf32> -> vector<32x256xf32>
    %c0_45 = arith.constant 0 : index
    %c0_46 = arith.constant 0 : index
    %44 = vector.load %arg4[%c0_45, %c0_46] : memref<32x1xf32, #tpu.memory_space<vmem>>, vector<32x1xf32>
    %45 = vector.broadcast %44 : vector<32x1xf32> to vector<32x256xf32>
    %46 = arith.addf %43, %45 : vector<32x256xf32>
    %c0_47 = arith.constant 0 : index
    %c0_48 = arith.constant 0 : index
    %c0_49 = arith.constant 0 : index
    %47 = vector.load %arg5[%c0_47, %c0_48, %c0_49] : memref<1x32x256xf32, #tpu.memory_space<vmem>>, vector<1x32x256xf32>
    %48 = vector.shape_cast %47 : vector<1x32x256xf32> to vector<32x256xf32>
    %49 = vector.shape_cast %46 : vector<32x256xf32> to vector<1x32x256xf32>
    tpu.vector_store %arg5[%c0_47, %c0_48, %c0_49], %49 {strides = array<i32>} : memref<1x32x256xf32, #tpu.memory_space<vmem>>, vector<1x32x256xf32>,
    return
  }
  func.func @transform_0(%arg0: i32) -> (i32, i32, i32) {
    %c0_i32 = arith.constant 0 : i32
    %c0_i32_0 = arith.constant 0 : i32
    %c0_i32_1 = arith.constant 0 : i32
    return %arg0, %c0_i32, %c0_i32_0 : i32, i32, i32
  }
  func.func @transform_1(%arg0: i32) -> (i32, i32) {
    %c0_i32 = arith.constant 0 : i32
    %c0_i32_0 = arith.constant 0 : i32
    %c0_i32_1 = arith.constant 0 : i32
    return %c0_i32, %c0_i32_0 : i32, i32
  }
  func.func @transform_2(%arg0: i32) -> (i32, i32) {
    %c0_i32 = arith.constant 0 : i32
    %c0_i32_0 = arith.constant 0 : i32
    %c0_i32_1 = arith.constant 0 : i32
    return %c0_i32, %c0_i32_0 : i32, i32
  }
  func.func @transform_3(%arg0: i32) -> (i32, i32) {
    %c0_i32 = arith.constant 0 : i32
    %c0_i32_0 = arith.constant 0 : i32
    %c0_i32_1 = arith.constant 0 : i32
    return %c0_i32, %c0_i32_0 : i32, i32
  }
  func.func @transform_4(%arg0: i32) -> (i32, i32, i32) {
    %c0_i32 = arith.constant 0 : i32
    %c0_i32_0 = arith.constant 0 : i32
    %c0_i32_1 = arith.constant 0 : i32
    return %arg0, %c0_i32, %c0_i32_0 : i32, i32, i32
  }
}

</mosaic_0001>

<llo_original>
// kernel: tile.28
$region0: #{tile.28}
  #allocation0 [shape = 's32[1]{0}', space=sflag, size = 0x4, scoped, tag = 'scoped memory for tile.28']
  %s0 = inlined_call_operand.vmem [shape: f32[8], index: 0, kind: input, shape index: {}]
  %s1 = inlined_call_operand.vmem [shape: f32[4,8], index: 1, kind: output, shape index: {}]
  // Predicated region
  $region2: #{tile.28} parent=0 // pred_check
    _
  $region3: #{tile.28} parent=0 // pred_check_branch
    %3 = sbr.rel (0) target = $region5
  $region4: #{tile.28} parent=0 // pred_region
    _
  $region5: #{tile.28} parent=0 // pred_fallthru
    _
  %v4 = vld [vmem:[%s0] ss:$0 sm:$0xff]
  %5 = vst [vmem:[%s1] sm:$0xf] %v4

// kernel: tile.22
$region0: #{tile.22}
  #allocation0 [shape = 's32[1]{0}', space=sflag, size = 0x4, scoped, tag = 'scoped memory for tile.22']
  %s0 = inlined_call_operand.vmem [shape: f32[16], index: 0, kind: input, shape index: {}]
  %s1 = inlined_call_operand.vmem [shape: f32[16,16], index: 1, kind: output, shape index: {}]
  // Predicated region
  $region2: #{tile.22} parent=0 // pred_check
    _
  $region3: #{tile.22} parent=0 // pred_check_branch
    %3 = sbr.rel (0) target = $region5
  $region4: #{tile.22} parent=0 // pred_region
    _
  $region5: #{tile.22} parent=0 // pred_fallthru
    _
  %v4 = vld [vmem:[%s0] ss:$0 sm:$0xff]
  %5 = vst [vmem:[%s1] sm:$0xff] %v4
  %s6 = scalar_lea.vmem %s1, 8
  %7 = vst [vmem:[%s6] sm:$0xff] %v4

// kernel: tile.0
$region0: #{tile.0}
  %s0 = inlined_call_operand.vmem [shape: f32[4,8], index: 0, kind: input, shape index: {}]
  %s1 = inlined_call_operand.vmem [shape: f32[32,1], index: 1, kind: output, shape index: {}]
  $region1: #{tile.0} parent=0
    #allocation0 [shape = 'u8[4096]{0}', space=vmem, size = 0x1000, scoped, tag = 'scoped mem for input reshape']
    %s3 = sshllo.u32 0, 4
    %v4 = vld [vmem:[%s0] sm:%s3]
    %5 = vst [vmem:[#allocation0] sm:%s3] %v4
    %v6 = vld [vmem:[#allocation0] sm:$0xf]
    %vm7 = vcmask 7168
    %8 = vst.msk [vmem:[%s1] ss:$8 sm:$0xf] %vm7, %v6
    %v9 = vld [vmem:[#allocation0] sm:$0xf]
    %10 = vrot.lane.b32.xlu0 %v9, 127
    %v11 = vpop.permute.xlu0 %10
    %vm12 = vcmask 7168
    %s13 = scalar_lea.vmem %s1, 1
    %14 = vst.msk [vmem:[%s13] ss:$8 sm:$0xf] %vm12, %v11
    %v15 = vld [vmem:[#allocation0] sm:$0xf]
    %16 = vrot.lane.b32.xlu0 %v15, 126
    %v17 = vpop.permute.xlu0 %16
    %vm18 = vcmask 7168
    %s19 = scalar_lea.vmem %s1, 2
    %20 = vst.msk [vmem:[%s19] ss:$8 sm:$0xf] %vm18, %v17
    %v21 = vld [vmem:[#allocation0] sm:$0xf]
    %22 = vrot.lane.b32.xlu0 %v21, 125
    %v23 = vpop.permute.xlu0 %22
    %vm24 = vcmask 7168
    %s25 = scalar_lea.vmem %s1, 3
    %26 = vst.msk [vmem:[%s25] ss:$8 sm:$0xf] %vm24, %v23
    %v27 = vld [vmem:[#allocation0] sm:$0xf]
    %28 = vrot.lane.b32.xlu0 %v27, 124
    %v29 = vpop.permute.xlu0 %28
    %vm30 = vcmask 7168
    %s31 = scalar_lea.vmem %s1, 4
    %32 = vst.msk [vmem:[%s31] ss:$8 sm:$0xf] %vm30, %v29
    %v33 = vld [vmem:[#allocation0] sm:$0xf]
    %34 = vrot.lane.b32.xlu0 %v33, 123
    %v35 = vpop.permute.xlu0 %34
    %vm36 = vcmask 7168
    %s37 = scalar_lea.vmem %s1, 5
    %38 = vst.msk [vmem:[%s37] ss:$8 sm:$0xf] %vm36, %v35
    %v39 = vld [vmem:[#allocation0] sm:$0xf]
    %40 = vrot.lane.b32.xlu0 %v39, 122
    %v41 = vpop.permute.xlu0 %40
    %vm42 = vcmask 7168
    %s43 = scalar_lea.vmem %s1, 6
    %44 = vst.msk [vmem:[%s43] ss:$8 sm:$0xf] %vm42, %v41
    %v45 = vld [vmem:[#allocation0] sm:$0xf]
    %46 = vrot.lane.b32.xlu0 %v45, 121
    %v47 = vpop.permute.xlu0 %46
    %vm48 = vcmask 7168
    %s49 = scalar_lea.vmem %s1, 7
    %50 = vst.msk [vmem:[%s49] ss:$8 sm:$0xf] %vm48, %v47

// kernel: tile.24
$region0: #{tile.24}
  %s0 = inlined_call_operand.vmem [shape: f32[16,16], index: 0, kind: input, shape index: {}]
  %s1 = inlined_call_operand.vmem [shape: f32[1,256], index: 1, kind: output, shape index: {}]
  $region1: #{tile.24} parent=0
    #allocation0 [shape = 'u8[8192]{0}', space=vmem, size = 0x2000, scoped, tag = 'scoped mem for output reshape']
    %s2 = smov 3
    %v3 = vld [vmem:[%s0] ss:$8 sm:%s2]
    %vm4 = vcmask 130048
    %5 = vst.msk [vmem:[#allocation0] ss:$8 sm:$0x3] %vm4, %v3
    %s6 = scalar_lea.vmem %s0, 7
    %s7 = smov 3
    %v8 = vld [vmem:[%s6] ss:$8 sm:%s7]
    %9 = vrot.lane.b32.xlu0 %v8, 112
    %v10 = vpop.permute.xlu0 %9
    %vm11 = vcmask 1048448
    %12 = vst.msk [vmem:[#allocation0] ss:$8 sm:$0x3] %vm11, %v10
    %s13 = scalar_lea.vmem %s0, 6
    %s14 = smov 3
    %v15 = vld [vmem:[%s13] ss:$8 sm:%s14]
    %16 = vrot.lane.b32.xlu0 %v15, 96
    %v17 = vpop.permute.xlu0 %16
    %vm18 = vcmask 917248
    %19 = vst.msk [vmem:[#allocation0] ss:$8 sm:$0x3] %vm18, %v17
    %s20 = scalar_lea.vmem %s0, 5
    %s21 = smov 3
    %v22 = vld [vmem:[%s20] ss:$8 sm:%s21]
    %23 = vrot.lane.b32.xlu0 %v22, 80
    %v24 = vpop.permute.xlu0 %23
    %vm25 = vcmask 786048
    %26 = vst.msk [vmem:[#allocation0] ss:$8 sm:$0x3] %vm25, %v24
    %s27 = scalar_lea.vmem %s0, 4
    %s28 = smov 3
    %v29 = vld [vmem:[%s27] ss:$8 sm:%s28]
    %30 = vrot.lane.b32.xlu0 %v29, 64
    %v31 = vpop.permute.xlu0 %30
    %vm32 = vcmask 654848
    %33 = vst.msk [vmem:[#allocation0] ss:$8 sm:$0x3] %vm32, %v31
    %s34 = scalar_lea.vmem %s0, 3
    %s35 = smov 3
    %v36 = vld [vmem:[%s34] ss:$8 sm:%s35]
    %37 = vrot.lane.b32.xlu0 %v36, 48
    %v38 = vpop.permute.xlu0 %37
    %vm39 = vcmask 523648
    %40 = vst.msk [vmem:[#allocation0] ss:$8 sm:$0x3] %vm39, %v38
    %s41 = scalar_lea.vmem %s0, 2
    %s42 = smov 3
    %v43 = vld [vmem:[%s41] ss:$8 sm:%s42]
    %44 = vrot.lane.b32.xlu0 %v43, 32
    %v45 = vpop.permute.xlu0 %44
    %vm46 = vcmask 392448
    %47 = vst.msk [vmem:[#allocation0] ss:$8 sm:$0x3] %vm46, %v45
    %s48 = scalar_lea.vmem %s0, 1
    %s49 = smov 3
    %v50 = vld [vmem:[%s48] ss:$8 sm:%s49]
    %51 = vrot.lane.b32.xlu0 %v50, 16
    %v52 = vpop.permute.xlu0 %51
    %vm53 = vcmask 261248
    %54 = vst.msk [vmem:[#allocation0] ss:$8 sm:$0x3] %vm53, %v52
    %s56 = sshllo.u32 0, 1
    %v58 = vld [vmem:[#allocation0] sm:%s56]
    %s59 = sshllo.u32 0, 1
    %60 = vst [vmem:[%s1] sm:%s59] %v58
    %s61 = scalar_lea.vmem [#allocation0], 8
    %v62 = vld [vmem:[%s61] sm:%s56]
    %s63 = sshllo.u32 0, 1
    %s64 = scalar_lea.vmem %s1, 1
    %65 = vst [vmem:[%s64] sm:%s63] %v62

// kernel: up_forward.1
$region0: #{up_forward.1}
  #allocation0 [shape = 'u32[]', space=smem, size = 0x4, offset = 0x4, fixed_abs, tag = 'smem constant byte address 0x4 - core index']
  #allocation1 [shape = 'u32[144,128]{1,0:T(1,128)}', space=vmem, size = 0x12000, scoped, tag = 'internal scratch']
  #allocation2 [shape = 'f32[4,290]{1,0:T(4,128)}', space=vmem, size = 0x1800, scoped, tag = 'scratch operand']
  #allocation3 [shape = 'f32[36,256]{1,0:T(8,128)}', space=vmem, size = 0xa000, scoped, tag = 'scratch operand']
  %s0 = inlined_call_operand.vmem [shape: f32[2,4,256], index: 0, kind: input, shape index: {}]
  %s1 = inlined_call_operand.vmem [shape: f32[32,36], index: 1, kind: input, shape index: {}]
  %s2 = inlined_call_operand.vmem [shape: f32[2,256], index: 2, kind: input, shape index: {}]
  %s3 = inlined_call_operand.vmem [shape: f32[32,1], index: 3, kind: input, shape index: {}]
  %s4 = inlined_call_operand.vmem [shape: f32[2,32,256], index: 4, kind: output, shape index: {}]
  %s5 = sld [smem:[#allocation0]]
  $region49: #{up_forward.1} parent=0
    _
  %s7 = ssub.s32 1, %s5
  %s8 = scalar_select 0, %s7, %s5
  loop: start=0, step=1, limit=4
  $region2: #{up_forward.1} parent=0 // loop_pre_header
    _
  $region3: #{up_forward.1} parent=0 // loop_header
    %s10 = sphi 0, %s14
    %p11 = scmp.ge.s32.totalorder %s10, 4
    %s20 = sphi 0, %s22
    %s23 = sphi 0, %s20
    %s24 = sphi 0, %s23
    %s40 = sphi 0, %s24
    %s44 = sphi 0, %s44
    %s46 = sphi 0, %s44
    %s47 = sphi 0, %s46
    %s61 = sphi 0, %s47
    %s65 = sphi 0, %s65
    %s67 = sphi 0, %s65
    %s68 = sphi 0, %s67
    %s82 = sphi 0, %s68
    %s86 = sphi 0, %s86
    %s88 = sphi 0, %s86
    %s89 = sphi 0, %s88
    %s103 = sphi 0, %s89
    %s109 = sphi 0, %s111
    %s112 = sphi 0, %s109
    %s113 = sphi 0, %s112
    %s129 = sphi 0, %s113
  $region4: #{up_forward.1} parent=0 // loop_header_branch
    %13 = sbr.rel (%p11) target = $region8
  $region5: #{up_forward.1} parent=0 // loop_body
    %s15 = ssub.s32 %s10, 1
    %s16 = ssub.s32 %s10, 2
    %s17 = sadd.s32 %s10, 1
    %s18 = ssub.s32 %s10, %s17
    %p19 = scmp.eq.s32.totalorder %s18, 0
    %s21 = sadd.s32 %s20, 1
    %s22 = scalar_select %p19, %s20, %s21
    %p25 = pneg %p19
    %p26 = scmp.eq.s32.totalorder %s10, 1
    %p27 = por %p25, %p26
    %p28 = scmp.ne.s32.totalorder %s20, %s23
    %p29 = scmp.eq.s32.totalorder %s10, 0
    %p30 = por %p28, %p29
    %p31 = scmp.ne.s32.totalorder %s20, %s23
    %p32 = scmp.eq.s32.totalorder %s15, 1
    %p33 = por %p31, %p32
    %p34 = scmp.ne.s32.totalorder %s23, %s24
    %p35 = scmp.eq.s32.totalorder %s15, 0
    %p36 = por %p34, %p35
    %p37 = scmp.ne.s32.totalorder %s23, %s24
    %p38 = scmp.eq.s32.totalorder %s16, 1
    %p39 = por %p37, %p38
    %p41 = scmp.ne.s32.totalorder %s24, %s40
    %p42 = scmp.eq.s32.totalorder %s16, 0
    %p43 = por %p41, %p42
    %s45 = sadd.s32 %s44, 1
    %p48 = scmp.eq.s32.totalorder %s10, 1
    %p49 = scmp.ne.s32.totalorder %s44, %s46
    %p50 = scmp.eq.s32.totalorder %s10, 0
    %p51 = por %p49, %p50
    %p52 = scmp.ne.s32.totalorder %s44, %s46
    %p53 = scmp.eq.s32.totalorder %s15, 1
    %p54 = por %p52, %p53
    %p55 = scmp.ne.s32.totalorder %s46, %s47
    %p56 = scmp.eq.s32.totalorder %s15, 0
    %p57 = por %p55, %p56
    %p58 = scmp.ne.s32.totalorder %s46, %s47
    %p59 = scmp.eq.s32.totalorder %s16, 1
    %p60 = por %p58, %p59
    %p62 = scmp.ne.s32.totalorder %s47, %s61
    %p63 = scmp.eq.s32.totalorder %s16, 0
    %p64 = por %p62, %p63
    %s66 = sadd.s32 %s65, 1
    %p69 = scmp.eq.s32.totalorder %s10, 1
    %p70 = scmp.ne.s32.totalorder %s65, %s67
    %p71 = scmp.eq.s32.totalorder %s10, 0
    %p72 = por %p70, %p71
    %p73 = scmp.ne.s32.totalorder %s65, %s67
    %p74 = scmp.eq.s32.totalorder %s15, 1
    %p75 = por %p73, %p74
    %p76 = scmp.ne.s32.totalorder %s67, %s68
    %p77 = scmp.eq.s32.totalorder %s15, 0
    %p78 = por %p76, %p77
    %p79 = scmp.ne.s32.totalorder %s67, %s68
    %p80 = scmp.eq.s32.totalorder %s16, 1
    %p81 = por %p79, %p80
    %p83 = scmp.ne.s32.totalorder %s68, %s82
    %p84 = scmp.eq.s32.totalorder %s16, 0
    %p85 = por %p83, %p84
    %s87 = sadd.s32 %s86, 1
    %p90 = scmp.eq.s32.totalorder %s10, 1
    %p91 = scmp.ne.s32.totalorder %s86, %s88
    %p92 = scmp.eq.s32.totalorder %s10, 0
    %p93 = por %p91, %p92
    %p94 = scmp.ne.s32.totalorder %s86, %s88
    %p95 = scmp.eq.s32.totalorder %s15, 1
    %p96 = por %p94, %p95
    %p97 = scmp.ne.s32.totalorder %s88, %s89
    %p98 = scmp.eq.s32.totalorder %s15, 0
    %p99 = por %p97, %p98
    %p100 = scmp.ne.s32.totalorder %s88, %s89
    %p101 = scmp.eq.s32.totalorder %s16, 1
    %p102 = por %p100, %p101
    %p104 = scmp.ne.s32.totalorder %s89, %s103
    %p105 = scmp.eq.s32.totalorder %s16, 0
    %p106 = por %p104, %p105
    %s107 = ssub.s32 %s10, %s17
    %p108 = scmp.eq.s32.totalorder %s107, 0
    %s110 = sadd.s32 %s109, 1
    %s111 = scalar_select %p108, %s109, %s110
    %p114 = pneg %p108
    %p115 = scmp.eq.s32.totalorder %s10, 1
    %p116 = por %p114, %p115
    %p117 = scmp.ne.s32.totalorder %s109, %s112
    %p118 = scmp.eq.s32.totalorder %s10, 0
    %p119 = por %p117, %p118
    %p120 = scmp.ne.s32.totalorder %s109, %s112
    %p121 = scmp.eq.s32.totalorder %s15, 1
    %p122 = por %p120, %p121
    %p123 = scmp.ne.s32.totalorder %s112, %s113
    %p124 = scmp.eq.s32.totalorder %s15, 0
    %p125 = por %p123, %p124
    %p126 = scmp.ne.s32.totalorder %s112, %s113
    %p127 = scmp.eq.s32.totalorder %s16, 1
    %p128 = por %p126, %p127
    %p130 = scmp.ne.s32.totalorder %s113, %s129
    %p131 = scmp.eq.s32.totalorder %s16, 0
    %p132 = por %p130, %p131
    %p133 = scmp.le.s32.totalorder 1, %s10
    %p134 = scmp.lt.s32.totalorder %s10, 3
    %p135 = pnand %p133, %p134
    %p136 = pneg %p135
    // Predicated region
    $region9: #{up_forward.1} parent=5 // pred_check
      _
    $region10: #{up_forward.1} parent=5 // pred_check_branch
      %138 = sbr.rel (%p135) target = $region12
    $region11: #{up_forward.1} parent=5 // pred_region
      %s139 = ssub.s32 %s10, 1
      // Predicated region
      $region13: #{up_forward.1} parent=11 // pred_check
        %p140 = pneg %p57
      $region14: #{up_forward.1} parent=11 // pred_check_branch
        %142 = sbr.rel (%p140) target = $region16
      $region15: #{up_forward.1} parent=11 // pred_region
        _
      $region16: #{up_forward.1} parent=11 // pred_fallthru
        _
      // Predicated region
      $region17: #{up_forward.1} parent=11 // pred_check
        %p143 = pneg %p78
      $region18: #{up_forward.1} parent=11 // pred_check_branch
        %145 = sbr.rel (%p143) target = $region20
      $region19: #{up_forward.1} parent=11 // pred_region
        _
      $region20: #{up_forward.1} parent=11 // pred_fallthru
        _
      // Predicated region
      $region21: #{up_forward.1} parent=11 // pred_check
        %p146 = pneg %p99
      $region22: #{up_forward.1} parent=11 // pred_check_branch
        %148 = sbr.rel (%p146) target = $region24
      $region23: #{up_forward.1} parent=11 // pred_region
        _
      $region24: #{up_forward.1} parent=11 // pred_fallthru
        _
    $region12: #{up_forward.1} parent=5 // pred_fallthru
      _
    %p149 = scmp.lt.s32.totalorder %s10, 2
    // Predicated region
    $region25: #{up_forward.1} parent=5 // pred_check
      %p150 = pneg %p149
    $region26: #{up_forward.1} parent=5 // pred_check_branch
      %152 = sbr.rel (%p150) target = $region28
    $region27: #{up_forward.1} parent=5 // pred_region
      // Predicated region
      $region29: #{up_forward.1} parent=27 // pred_check
        %p153 = pneg %p30
      $region30: #{up_forward.1} parent=27 // pred_check_branch
        %155 = sbr.rel (%p153) target = $region32
      $region31: #{up_forward.1} parent=27 // pred_region
        %p156 = scmp.lt.s32.totalorder %s10, 1
        %s157 = scalar_select %p156, %s10, 1
        %s158 = smul.addr %s157, 2
        %s159 = smul.addr %s158, 4
        %s160 = scalar_lea.vmem %s0, %s159
      $region32: #{up_forward.1} parent=27 // pred_fallthru
        _
    $region28: #{up_forward.1} parent=5 // pred_fallthru
      _
    %p161 = scmp.le.s32.totalorder 1, %s10
    %p162 = scmp.lt.s32.totalorder %s10, 3
    %p163 = pnand %p161, %p162
    %p164 = pneg %p163
    // Predicated region
    $region33: #{up_forward.1} parent=5 // pred_check
      _
    $region34: #{up_forward.1} parent=5 // pred_check_branch
      %166 = sbr.rel (%p163) target = $region36
    $region35: #{up_forward.1} parent=5 // pred_region
      %s167 = ssub.s32 %s10, 1
      %p168 = scmp.lt.s32.totalorder %s15, 1
      %s169 = scalar_select %p168, %s15, 1
      %s170 = smul.addr %s169, 2
      %s171 = smul.addr %s170, 4
      %s172 = scalar_lea.vmem %s0, %s171
      %p173 = pneg %p36
      %p174 = pneg %p33
      %p175 = pneg %p57
      %p176 = pneg %p54
      %p177 = pneg %p78
      %p178 = pneg %p75
      %p179 = pneg %p99
      %p180 = pneg %p96
      %p181 = pneg %p125
      %p182 = pneg %p122
      %p183 = scmp.lt.s32.totalorder %s15, 1
      %s184 = scalar_select %p183, %s15, 1
      %s185 = smul.addr %s184, 8
      %s186 = smul.addr %s185, 8
      %s187 = scalar_lea.vmem %s4, %s186
      %p188 = scmp.lt.s32.totalorder %s15, 1
      %s189 = scalar_select %p188, %s15, 1
      %s190 = smul.addr %s189, 2
      %s191 = smul.addr %s190, 4
      %s192 = scalar_lea.vmem %s0, %s191
      %p193 = scmp.lt.s32.totalorder %s15, 1
      %s194 = scalar_select %p193, %s15, 1
      %s195 = smul.addr %s194, 8
      %s196 = smul.addr %s195, 8
      %s197 = scalar_lea.vmem %s4, %s196
      %198 = vst [vmem:[#allocation2] sm:$0xff] 0.0
      %vm199 = vcmask 273408
      %200 = vst.msk [vmem:[#allocation2 + $0x8] sm:$0xf] %vm199, 0.0
      %v201 = vld [vmem:[%s192] sm:$0xff]
      %203 = vrot.lane.b32.xlu0 %v201, 17
      %v204 = vpop.permute.xlu0 %203
      %v205 = vrot.slane %v204, 4
      %vm206 = vcmask 138240
      %v207 = vsel %vm206, %v205, %v204
      %vm210 = vcmask 1043592
      %vm211 = vcmask 1047556
      %vm212 = vmor %vm211, %vm210
      %213 = vst.msk [vmem:[#allocation2] sm:$0xff] %vm212, %v207
      %vm214 = vcmask 134144
      %215 = vst.msk [vmem:[#allocation2 + $0x8] sm:$0xf] %vm214, %v205
      %v216 = vld [vmem:[#allocation2] sm:$0xff]
      %v217 = vld [vmem:[%s2] ss:$2 sm:$0x3]
      %v219 = vlaneseq
      %v220 = vshrl.u32 %v219, 7
      %v221 = vsub.s32 0, %v220
      %v222 = vrot.slane %v217, %v221
      %v223 = vlaneseq
      %v224 = vshrl.u32 %v223, 7
      %v225 = vsub.s32 1, %v224
      %v226 = vrot.slane %v217, %v225
      %v227 = vcombine.low %v222, %v226
      %v229 = vmul.f32 %v216, %v227
      %v231 = vcombine.high %v229, %v229
      %233 = vst [vmem:[#allocation3] sm:$0xf] %v229
      %234 = vst [vmem:[#allocation3 + $0x8] sm:$0xf] %v231
      %v235 = vld [vmem:[#allocation2] sm:$0xff]
      %v236 = vld [vmem:[#allocation2 + $0x8] sm:$0xf]
      %v239 = vcombine.low %v235, %v235
      %v240 = vcombine.low %v236, %v236
      %241 = vrot.lane.b32.xlu0 %v239, 127
      %v242 = vpop.permute.xlu0 %241
      %243 = vrot.lane.b32.xlu0 %v235, 127
      %v244 = vpop.permute.xlu0 %243
      %245 = vrot.lane.b32.xlu0 %v240, 127
      %v246 = vpop.permute.xlu0 %245
      %vm247 = vcmask 1039360
      %v248 = vsel %vm247, %v242, %v244
      %v249 = vsel %vm247, %v244, %v246
      %252 = vst [vmem:[#allocation3] sm:$0xf0] %v248
      %253 = vst [vmem:[#allocation3 + $0x8] sm:$0xf0] %v249
      %v254 = vld [vmem:[#allocation2] sm:$0xff]
      %v255 = vld [vmem:[#allocation2 + $0x8] sm:$0xf]
      %s256 = scalar_lea.vmem %s2, 1
      %v257 = vld [vmem:[%s256] ss:$2 sm:$0x3]
      %v259 = vlaneseq
      %v260 = vshrl.u32 %v259, 7
      %v261 = vsub.s32 0, %v260
      %v262 = vrot.slane %v257, %v261
      %v263 = vlaneseq
      %v264 = vshrl.u32 %v263, 7
      %v265 = vsub.s32 1, %v264
      %v266 = vrot.slane %v257, %v265
      %v267 = vcombine.low %v262, %v266
      %268 = vrot.lane.b32.xlu0 %v267, 2
      %v269 = vpop.permute.xlu0 %268
      %v270 = vrot.slane %v269, 4
      %vm271 = vcmask 15360
      %v272 = vsel %vm271, %v270, %v269
      %v275 = vmul.f32 %v254, %v272
      %v276 = vmul.f32 %v255, %v270
      %v279 = vcombine.high %v275, %v275
      %280 = vrot.lane.b32.xlu0 %v275, 126
      %v281 = vpop.permute.xlu0 %280
      %282 = vrot.lane.b32.xlu0 %v279, 126
      %v283 = vpop.permute.xlu0 %282
      %284 = vrot.lane.b32.xlu0 %v276, 126
      %v285 = vpop.permute.xlu0 %284
      %vm286 = vcmask 1031168
      %v287 = vsel %vm286, %v281, %v283
      %v288 = vsel %vm286, %v283, %v285
      %291 = vst [vmem:[#allocation3 + $0x10] sm:$0xf] %v287
      %292 = vst [vmem:[#allocation3 + $0x18] sm:$0xf] %v288
      %v293 = vld [vmem:[#allocation2] sm:$0xff]
      %v294 = vld [vmem:[#allocation2 + $0x8] sm:$0xf]
      %v295 = vld [vmem:[%s2] ss:$2 sm:$0x3]
      %v297 = vlaneseq
      %v298 = vshrl.u32 %v297, 7
      %v299 = vsub.s32 0, %v298
      %v300 = vrot.slane %v295, %v299
      %v301 = vlaneseq
      %v302 = vshrl.u32 %v301, 7
      %v303 = vsub.s32 1, %v302
      %v304 = vrot.slane %v295, %v303
      %v305 = vcombine.low %v300, %v304
      %306 = vrot.lane.b32.xlu0 %v305, 16
      %v307 = vpop.permute.xlu0 %306
      %v308 = vrot.slane %v307, 4
      %vm309 = vcmask 130048
      %v310 = vsel %vm309, %v308, %v307
      %v313 = vmul.f32 %v293, %v310
      %v314 = vmul.f32 %v294, %v308
      %v317 = vcombine.low %v313, %v313
      %v318 = vcombine.low %v314, %v314
      %319 = vrot.lane.b32.xlu0 %v317, 112
      %v320 = vpop.permute.xlu0 %319
      %321 = vrot.lane.b32.xlu0 %v313, 112
      %v322 = vpop.permute.xlu0 %321
      %323 = vrot.lane.b32.xlu0 %v318, 112
      %v324 = vpop.permute.xlu0 %323
      %vm325 = vcmask 916480
      %v326 = vsel %vm325, %v320, %v322
      %v327 = vsel %vm325, %v322, %v324
      %330 = vst [vmem:[#allocation3 + $0x10] sm:$0xf0] %v326
      %331 = vst [vmem:[#allocation3 + $0x18] sm:$0xf0] %v327
      %v332 = vld [vmem:[#allocation2] sm:$0xff]
      %v333 = vld [vmem:[#allocation2 + $0x8] sm:$0xf]
      %v336 = vcombine.high %v332, %v332
      %337 = vrot.lane.b32.xlu0 %v332, 111
      %v338 = vpop.permute.xlu0 %337
      %339 = vrot.lane.b32.xlu0 %v336, 111
      %v340 = vpop.permute.xlu0 %339
      %341 = vrot.lane.b32.xlu0 %v333, 111
      %v342 = vpop.permute.xlu0 %341
      %vm343 = vcmask 908288
      %v344 = vsel %vm343, %v338, %v340
      %v345 = vsel %vm343, %v340, %v342
      %348 = vst [vmem:[#allocation3 + $0x20] sm:$0xf] %v344
      %349 = vst [vmem:[#allocation3 + $0x28] sm:$0xf] %v345
      %v350 = vld [vmem:[#allocation2] sm:$0xff]
      %v351 = vld [vmem:[#allocation2 + $0x8] sm:$0xf]
      %v352 = vld [vmem:[%s256] ss:$2 sm:$0x3]
      %v354 = vlaneseq
      %v355 = vshrl.u32 %v354, 7
      %v356 = vsub.s32 0, %v355
      %v357 = vrot.slane %v352, %v356
      %v358 = vlaneseq
      %v359 = vshrl.u32 %v358, 7
      %v360 = vsub.s32 1, %v359
      %v361 = vrot.slane %v352, %v360
      %v362 = vcombine.low %v357, %v361
      %363 = vrot.lane.b32.xlu0 %v362, 18
      %v364 = vpop.permute.xlu0 %363
      %v365 = vrot.slane %v364, 4
      %vm366 = vcmask 146432
      %v367 = vsel %vm366, %v365, %v364
      %v370 = vmul.f32 %v350, %v367
      %v371 = vmul.f32 %v351, %v365
      %v374 = vcombine.low %v370, %v370
      %v375 = vcombine.low %v371, %v371
      %376 = vrot.lane.b32.xlu0 %v374, 110
      %v377 = vpop.permute.xlu0 %376
      %378 = vrot.lane.b32.xlu0 %v370, 110
      %v379 = vpop.permute.xlu0 %378
      %380 = vrot.lane.b32.xlu0 %v375, 110
      %v381 = vpop.permute.xlu0 %380
      %vm382 = vcmask 900096
      %v383 = vsel %vm382, %v377, %v379
      %v384 = vsel %vm382, %v379, %v381
      %387 = vst [vmem:[#allocation3 + $0x20] sm:$0xf0] %v383
      %388 = vst [vmem:[#allocation3 + $0x28] sm:$0xf0] %v384
      %v389 = vld [vmem:[#allocation2] sm:$0xff]
      %v390 = vld [vmem:[#allocation2 + $0x8] sm:$0xf]
      %v391 = vld [vmem:[%s2] ss:$2 sm:$0x3]
      %v393 = vlaneseq
      %v394 = vshrl.u32 %v393, 7
      %v395 = vsub.s32 0, %v394
      %v396 = vrot.slane %v391, %v395
      %v397 = vlaneseq
      %v398 = vshrl.u32 %v397, 7
      %v399 = vsub.s32 1, %v398
      %v400 = vrot.slane %v391, %v399
      %v401 = vcombine.low %v396, %v400
      %402 = vrot.lane.b32.xlu0 %v401, 32
      %v403 = vpop.permute.xlu0 %402
      %v404 = vrot.slane %v403, 4
      %vm405 = vcmask 261120
      %v406 = vsel %vm405, %v404, %v403
      %v409 = vmul.f32 %v389, %v406
      %v410 = vmul.f32 %v390, %v404
      %v413 = vcombine.high %v409, %v409
      %414 = vrot.lane.b32.xlu0 %v409, 96
      %v415 = vpop.permute.xlu0 %414
      %416 = vrot.lane.b32.xlu0 %v413, 96
      %v417 = vpop.permute.xlu0 %416
      %418 = vrot.lane.b32.xlu0 %v410, 96
      %v419 = vpop.permute.xlu0 %418
      %vm420 = vcmask 785408
      %v421 = vsel %vm420, %v415, %v417
      %v422 = vsel %vm420, %v417, %v419
      %425 = vst [vmem:[#allocation3 + $0x30] sm:$0xf] %v421
      %426 = vst [vmem:[#allocation3 + $0x38] sm:$0xf] %v422
      %v427 = vld [vmem:[#allocation2] sm:$0xff]
      %v428 = vld [vmem:[#allocation2 + $0x8] sm:$0xf]
      %v431 = vcombine.low %v427, %v427
      %v432 = vcombine.low %v428, %v428
      %433 = vrot.lane.b32.xlu0 %v431, 95
      %v434 = vpop.permute.xlu0 %433
      %435 = vrot.lane.b32.xlu0 %v427, 95
      %v436 = vpop.permute.xlu0 %435
      %437 = vrot.lane.b32.xlu0 %v432, 95
      %v438 = vpop.permute.xlu0 %437
      %vm439 = vcmask 777216
      %v440 = vsel %vm439, %v434, %v436
      %v441 = vsel %vm439, %v436, %v438
      %444 = vst [vmem:[#allocation3 + $0x30] sm:$0xf0] %v440
      %445 = vst [vmem:[#allocation3 + $0x38] sm:$0xf0] %v441
      %v446 = vld [vmem:[#allocation2] sm:$0xff]
      %v447 = vld [vmem:[#allocation2 + $0x8] sm:$0xf]
      %v448 = vld [vmem:[%s256] ss:$2 sm:$0x3]
      %v450 = vlaneseq
      %v451 = vshrl.u32 %v450, 7
      %v452 = vsub.s32 0, %v451
      %v453 = vrot.slane %v448, %v452
      %v454 = vlaneseq
      %v455 = vshrl.u32 %v454, 7
      %v456 = vsub.s32 1, %v455
      %v457 = vrot.slane %v448, %v456
      %v458 = vcombine.low %v453, %v457
      %459 = vrot.lane.b32.xlu0 %v458, 34
      %v460 = vpop.permute.xlu0 %459
      %v461 = vrot.slane %v460, 4
      %vm462 = vcmask 277504
      %v463 = vsel %vm462, %v461, %v460
      %v466 = vmul.f32 %v446, %v463
      %v467 = vmul.f32 %v447, %v461
      %v470 = vcombine.high %v466, %v466
      %471 = vrot.lane.b32.xlu0 %v466, 94
      %v472 = vpop.permute.xlu0 %471
      %473 = vrot.lane.b32.xlu0 %v470, 94
      %v474 = vpop.permute.xlu0 %473
      %475 = vrot.lane.b32.xlu0 %v467, 94
      %v476 = vpop.permute.xlu0 %475
      %vm477 = vcmask 769024
      %v478 = vsel %vm477, %v472, %v474
      %v479 = vsel %vm477, %v474, %v476
      %482 = vst [vmem:[#allocation3 + $0x40] sm:$0xf] %v478
      %483 = vst [vmem:[#allocation3 + $0x48] sm:$0xf] %v479
      %v484 = vld [vmem:[%s1] sm:$0xff]
      %v485 = vld [vmem:[%s1 + $0x8] sm:$0xff]
      %v486 = vld [vmem:[%s1 + $0x10] sm:$0xff]
      %v487 = vld [vmem:[%s1 + $0x18] sm:$0xff]
      %v488 = vld [vmem:[#allocation3] sm:$0xff]
      %v489 = vld [vmem:[#allocation3 + $0x8] sm:$0xff]
      %v490 = vld [vmem:[#allocation3 + $0x10] sm:$0xff]
      %v491 = vld [vmem:[#allocation3 + $0x18] sm:$0xff]
      %v492 = vld [vmem:[#allocation3 + $0x20] sm:$0xff]
      %v493 = vld [vmem:[#allocation3 + $0x28] sm:$0xff]
      %v494 = vld [vmem:[#allocation3 + $0x30] sm:$0xff]
      %v495 = vld [vmem:[#allocation3 + $0x38] sm:$0xff]
      %v496 = vld [vmem:[#allocation3 + $0x40] sm:$0xf]
      %v497 = vld [vmem:[#allocation3 + $0x48] sm:$0xf]
      %v498 = vld [vmem:[%s3] sm:$0xff]
      %v499 = vld [vmem:[%s3 + $0x8] sm:$0xff]
      %v500 = vld [vmem:[%s3 + $0x10] sm:$0xff]
      %v501 = vld [vmem:[%s3 + $0x18] sm:$0xff]
      %503 = vset.pattern.permute.xlu0 0
      %504 = vperm.xlu0 %503, %v498
      %v505 = vpop.permute.xlu0 %504
      %508 = vset.pattern.permute.xlu0 0
      %509 = vperm.xlu0 %508, %v499
      %v510 = vpop.permute.xlu0 %509
      %513 = vset.pattern.permute.xlu0 0
      %514 = vperm.xlu0 %513, %v500
      %v515 = vpop.permute.xlu0 %514
      %518 = vset.pattern.permute.xlu0 0
      %519 = vperm.xlu0 %518, %v501
      %v520 = vpop.permute.xlu0 %519
      %vm522 = vcmask 293888
      %v524 = vsel %vm522, %v484, 0
      %v527 = vsel %vm522, %v485, 0
      %v530 = vsel %vm522, %v486, 0
      %v533 = vsel %vm522, %v487, 0
      %vm535 = vcmask 1043456
      %v537 = vsel %vm535, %v496, 0
      %v540 = vsel %vm535, %v497, 0
      %542 = vmatprep.subr.mxu0 %v489
      %543 = vmatpush1.msra.mxu0 %v488
      %544 = vmatprep.subr.mxu0 %v491
      %545 = vmatpush1.msra.mxu0 %v490
      %546 = vmatprep.subr.mxu0 %v493
      %547 = vmatpush1.msra.mxu0 %v492
      %548 = vmatprep.subr.mxu0 %v495
      %549 = vmatpush1.msra.mxu0 %v494
      %550 = vmatprep.subr.mxu0 %v540
      %551 = vmatpush1.msra.mxu0 %v537
      %552 = vmatprep.subr.mxu0 0.0
      %553 = vmatpush1.msra.mxu0 0.0
      %554 = vmatprep.subr.mxu0 0.0
      %555 = vmatpush1.msra.mxu0 0.0
      %556 = vmatprep.subr.mxu0 0.0
      %557 = vmatpush1.msra.mxu0 0.0
      %558 = vmatprep.subr.mxu0 0.0
      %559 = vmatpush1.msra.mxu0 0.0
      %560 = vmatprep.subr.mxu0 0.0
      %561 = vmatpush1.msra.mxu0 0.0
      %562 = vmatprep.subr.mxu0 0.0
      %563 = vmatpush1.msra.mxu0 0.0
      %564 = vmatprep.subr.mxu0 0.0
      %565 = vmatpush1.msra.mxu0 0.0
      %566 = vmatprep.subr.mxu0 0.0
      %567 = vmatpush1.msra.mxu0 0.0
      %568 = vmatprep.subr.mxu0 0.0
      %569 = vmatpush1.msra.mxu0 0.0
      %570 = vmatprep.subr.mxu0 0.0
      %571 = vmatpush1.msra.mxu0 0.0
      %572 = vmatprep.subr.mxu0 0.0
      %573 = vmatpush1.msra.mxu0 0.0
      %574 = vmatprep.subr.mxu0 0.0
      %575 = vmatpush1.msra.mxu0 0.0
      %576 = vmatprep.subr.mxu0 0.0
      %577 = vmatpush1.msra.mxu0 0.0
      %578 = vmatprep.subr.mxu0 0.0
      %579 = vmatpush1.msra.mxu0 0.0
      %580 = vmatprep.subr.mxu0 0.0
      %581 = vmatpush1.msra.mxu0 0.0
      %582 = vmatprep.subr.mxu0 0.0
      %583 = vmatpush1.msra.mxu0 0.0
      %584 = vmatprep.subr.mxu0 0.0
      %585 = vmatpush1.msra.mxu0 0.0
      %586 = vmatprep.subr.mxu0 0.0
      %587 = vmatpush1.msra.mxu0 0.0
      %588 = vmatprep.subr.mxu0 0.0
      %589 = vmatpush1.msra.mxu0 0.0
      %590 = vmatprep.subr.mxu0 0.0
      %591 = vmatpush1.msra.mxu0 0.0
      %592 = vmatprep.subr.mxu0 0.0
      %593 = vmatpush1.msra.mxu0 0.0
      %594 = vmatprep.subr.mxu0 0.0
      %595 = vmatpush1.msra.mxu0 0.0
      %596 = vmatprep.subr.mxu0 0.0
      %597 = vmatpush1.msra.mxu0 0.0
      %598 = vmatprep.subr.mxu0 0.0
      %599 = vmatpush1.msra.mxu0 0.0
      %600 = vmatprep.subr.mxu0 0.0
      %601 = vmatpush1.msra.mxu0 0.0
      %602 = vmatprep.subr.mxu0 0.0
      %603 = vmatpush1.msra.mxu0 0.0
      %604 = vmatprep.subr.mxu0 0.0
      %605 = vmatpush1.msra.mxu0 0.0
      %606 = vmatprep.mubr.f32.mxu0 0.0
      %607 = vmatmul.mubr.f32.gmra.mrb[0].mxu0 %v524
      %v608 = vpop.f32.mrb[0].mxu0
      %v609 = vadd.f32 %v505, %v608
      %v610 = vpop.f32.mrb[0].mxu0
      %v611 = vadd.f32 %v505, %v610
      %612 = vmatprep.mubr.f32.mxu0 0.0
      %613 = vmatmul.mubr.f32.gmra.mrb[0].mxu0 %v527
      %v614 = vpop.f32.mrb[0].mxu0
      %v615 = vadd.f32 %v510, %v614
      %v616 = vpop.f32.mrb[0].mxu0
      %v617 = vadd.f32 %v510, %v616
      %618 = vmatprep.mubr.f32.mxu0 0.0
      %619 = vmatmul.mubr.f32.gmra.mrb[0].mxu0 %v530
      %v620 = vpop.f32.mrb[0].mxu0
      %v621 = vadd.f32 %v515, %v620
      %v622 = vpop.f32.mrb[0].mxu0
      %v623 = vadd.f32 %v515, %v622
      %624 = vmatprep.mubr.f32.mxu0 0.0
      %625 = vmatmul.mubr.f32.gmra.mrb[0].mxu0 %v533
      %v626 = vpop.f32.mrb[0].mxu0
      %v627 = vadd.f32 %v520, %v626
      %v628 = vpop.f32.mrb[0].mxu0
      %v629 = vadd.f32 %v520, %v628
      %630 = vdwg.mxu0
      %631 = vst [vmem:[%s197] sm:$0xff] %v609
      %632 = vst [vmem:[%s197 + $0x8] sm:$0xff] %v611
      %633 = vst [vmem:[%s197 + $0x10] sm:$0xff] %v615
      %634 = vst [vmem:[%s197 + $0x18] sm:$0xff] %v617
      %635 = vst [vmem:[%s197 + $0x20] sm:$0xff] %v621
      %636 = vst [vmem:[%s197 + $0x28] sm:$0xff] %v623
      %637 = vst [vmem:[%s197 + $0x30] sm:$0xff] %v627
      %638 = vst [vmem:[%s197 + $0x38] sm:$0xff] %v629
      %p639 = scmp.lt.s32.totalorder %s15, 1
      %s640 = scalar_select %p639, %s15, 1
      %s641 = smul.addr %s640, 8
      %s642 = smul.addr %s641, 8
      %s643 = scalar_lea.vmem %s4, %s642
      // Predicated region
      $region37: #{up_forward.1} parent=35 // pred_check
        %p644 = pneg %p122
      $region38: #{up_forward.1} parent=35 // pred_check_branch
        %646 = sbr.rel (%p644) target = $region40
      $region39: #{up_forward.1} parent=35 // pred_region
        _
      $region40: #{up_forward.1} parent=35 // pred_fallthru
        _
    $region36: #{up_forward.1} parent=5 // pred_fallthru
      _
    %p647 = scmp.le.s32.totalorder 2, %s10
    // Predicated region
    $region41: #{up_forward.1} parent=5 // pred_check
      %p648 = pneg %p647
    $region42: #{up_forward.1} parent=5 // pred_check_branch
      %650 = sbr.rel (%p648) target = $region44
    $region43: #{up_forward.1} parent=5 // pred_region
      %s651 = ssub.s32 %s10, 2
      // Predicated region
      $region45: #{up_forward.1} parent=43 // pred_check
        %p652 = pneg %p128
      $region46: #{up_forward.1} parent=43 // pred_check_branch
        %654 = sbr.rel (%p652) target = $region48
      $region47: #{up_forward.1} parent=43 // pred_region
        %p655 = scmp.lt.s32.totalorder %s16, 1
        %s656 = scalar_select %p655, %s16, 1
        %s657 = smul.addr %s656, 8
        %s658 = smul.addr %s657, 8
        %s659 = scalar_lea.vmem %s4, %s658
      $region48: #{up_forward.1} parent=43 // pred_fallthru
        _
    $region44: #{up_forward.1} parent=5 // pred_fallthru
      _
  $region6: #{up_forward.1} parent=0 // loop_footer
    %s14 = sadd.s32 1, %s10
  $region7: #{up_forward.1} parent=0 // loop_footer_branch
    %9 = sbr.rel target = $region3
  $region8: #{up_forward.1} parent=0 // loop_exit
    _

</llo_original>
